<compile_context>
chip_gen: v7x
topology: tpu7x:2x2x1
jax: 0.10.0
libtpu: 0.0.40
codegen_flags: <defaults>
</compile_context>

<pallas_src>
import math

import jax
import jax.numpy as jnp
from jax.experimental import pallas as pl
from jax.experimental.pallas import tpu as pltpu


def _add_bias_kernel(x_ref, b_ref, o_ref):
    # (tile_rows, tile_cols) + (1, tile_cols) broadcast add on the VPU.
    o_ref[...] = x_ref[...] + b_ref[...]


def _round_up(v: int, m: int) -> int:
    return ((v + m - 1) // m) * m


def _sublane(itemsize: int) -> int:
    # f32 -> 8 rows / vreg, bf16/f16 -> 16, int8/fp8 -> 32.
    return {4: 8, 2: 16, 1: 32}.get(itemsize, 8)


def _pallas_rowwise_add(
    x2: jax.Array,
    bias_row: jax.Array,
    *,
    block_budget_bytes: int,
    max_tile_cols: int,
    min_row_steps: int = 4,
) -> jax.Array:
    """x2: (R, L), bias_row: (1, L) -> x2 + bias_row via one pallas_call."""
    R, L = x2.shape
    dtype = x2.dtype
    itemsize = jnp.dtype(dtype).itemsize
    sub = _sublane(itemsize)

    # ---- Column tiling: prefer full-width row slabs (contiguous DMA, 1-D grid,
    # bias fetched once).  Only tile columns when even a single sublane-high
    # full-width slab blows the per-step VMEM budget.
    full_width_slab = 4 * sub * L * itemsize  # 2 bufs x (x tile + out tile)
    if L % 128 != 0 or full_width_slab <= block_budget_bytes:
        tile_cols = L  # full extent: always legal
    else:
        tile_cols = max(128, (min(max_tile_cols, L) // 128) * 128)

    # ---- Row tiling: sublane-aligned, inside the VMEM budget, aiming for
    # >= min_row_steps steps along rows so the pipeline actually overlaps.
    if R <= sub:
        tile_rows = R  # full extent
    else:
        budget_rows = block_budget_bytes // (4 * tile_cols * itemsize)
        budget_rows = max(sub, (budget_rows // sub) * sub)
        target_rows = _round_up(pl.cdiv(R, min_row_steps), sub)
        tile_rows = max(sub, min(budget_rows, target_rows))

    n_row = pl.cdiv(R, tile_rows)
    n_col = pl.cdiv(L, tile_cols)

    # ---- VMEM limit from the real (layout-padded) footprint, +25% + floor.
    pad_rows = _round_up(tile_rows, sub)
    pad_cols = _round_up(tile_cols, 128)
    tile_bytes = pad_rows * pad_cols * itemsize
    bias_bytes = sub * pad_cols * itemsize
    footprint = 2 * (2 * tile_bytes) + 2 * bias_bytes
    vmem_limit = max(int(footprint * 1.25) + (1 << 20), 4 << 20)

    out_shape = jax.ShapeDtypeStruct((R, L), dtype)

    if n_col == 1:
        # 1-D grid over rows; bias block index constant -> DMA'd once.
        grid_spec = pltpu.PrefetchScalarGridSpec(
            num_scalar_prefetch=0,
            grid=(n_row,),
            in_specs=[
                pl.BlockSpec((tile_rows, tile_cols), lambda i: (i, 0)),
                pl.BlockSpec((1, tile_cols), lambda i: (0, 0)),
            ],
            out_specs=pl.BlockSpec((tile_rows, tile_cols), lambda i: (i, 0)),
        )
        dims = ("parallel",)
    else:
        # Column axis OUTER so bias block (0, j) is constant across the inner
        # row loop and is not re-fetched per step.
        grid_spec = pltpu.PrefetchScalarGridSpec(
            num_scalar_prefetch=0,
            grid=(n_col, n_row),
            in_specs=[
                pl.BlockSpec((tile_rows, tile_cols), lambda j, i: (i, j)),
                pl.BlockSpec((1, tile_cols), lambda j, i: (0, j)),
            ],
            out_specs=pl.BlockSpec((tile_rows, tile_cols), lambda j, i: (i, j)),
        )
        dims = ("parallel", "parallel")

    return pl.pallas_call(
        _add_bias_kernel,
        out_shape=out_shape,
        grid_spec=grid_spec,
        compiler_params=pltpu.CompilerParams(
            dimension_semantics=dims,
            vmem_limit_bytes=vmem_limit,
        ),
    )(x2, bias_row)


def add_bias(
    x: jax.Array,
    bias: jax.Array,
    *,
    block_budget_bytes: int = 16 * 1024 * 1024,  # 2 bufs x (x + out) per step; safe on v7x 64 MiB
    max_tile_cols: int = 32 * 1024,
    max_lane_width: int = 16 * 1024,
    xla_fallback_bytes: int = 1 << 20,
) -> jax.Array:
    """x: (N, C); bias: (C,). Returns x + bias[None, :] (PyTorch promotion)."""
    N, C = x.shape
    assert bias.shape == (C,), f"bias shape {bias.shape} != ({C},)"
    out_dtype = jnp.result_type(x.dtype, bias.dtype)
    itemsize = jnp.dtype(out_dtype).itemsize
    total = N * C

    # Tiny inputs: a standalone pallas_call is pure launch overhead and blocks
    # XLA fusion.  Pass xla_fallback_bytes=0 to force the Pallas path.
    if total * itemsize < xla_fallback_bytes:
        return x.astype(out_dtype) + bias.astype(out_dtype)[None, :]

    x = x.astype(out_dtype)
    bias = bias.astype(out_dtype)

    # ---- Lane-aligned fast path -------------------------------------------
    if C % 128 == 0:
        return _pallas_rowwise_add(
            x, bias.reshape(1, C),
            block_budget_bytes=block_budget_bytes, max_tile_cols=max_tile_cols)

    # ---- Lane-dense relayout: view flat data as rows of width L, a multiple
    # of both C and 128, so stores are unmasked full-lane vst.
    lane_unit = (C * 128) // math.gcd(C, 128)  # lcm(C, 128)
    rows_per = lane_unit // C                  # original rows per lane-dense row

    def lane_dense(x_part: jax.Array) -> jax.Array:
        n_part = x_part.shape[0]
        tot = n_part * C
        L = lane_unit
        while (L * 2 <= min(tot, max_lane_width)) and (tot % (L * 2) == 0):
            L *= 2
        x2 = x_part.reshape(tot // L, L)
        # TODO(synk): cache this tiled (1, L) bias row keyed by (dtype, L) at
        # module init to avoid re-materializing it on every call.
        b2 = jnp.tile(bias, L // C).reshape(1, L)
        out = _pallas_rowwise_add(
            x2, b2,
            block_budget_bytes=block_budget_bytes, max_tile_cols=max_tile_cols)
        return out.reshape(n_part, C)

    if total % lane_unit == 0:
        return lane_dense(x)

    # ---- Fallback: largest row-prefix lane-dense; the < rows_per remainder
    # rows (tiny) are handled by plain XLA instead of paying masked
    # lane-sparse stores on the whole array.
    N1 = (N // rows_per) * rows_per
    if N1 == 0:
        # Fewer rows than one lane-dense row: tiny -> plain XLA add.
        return x + bias[None, :]
    head = lane_dense(x[:N1])
    tail = x[N1:] + bias[None, :]
    return jnp.concatenate([head, tail], axis=0)


if __name__ == "__main__":
    key = jax.random.PRNGKey(0)
    k1, k2, k3, k4, k5, k6 = jax.random.split(key, 6)

    # Case 1: the module's typical tiny shape (batch=8, hidden=32).
    # C=32 < 128 -> lane-dense reshape path ((8,32) -> (1,256)); Pallas forced.
    x1 = jax.random.normal(k1, (8, 32), dtype=jnp.float32)
    b1 = jax.random.normal(k2, (32,), dtype=jnp.float32) * 0.1
    o1 = jax.block_until_ready(add_bias(x1, b1, xla_fallback_bytes=0))
    r1 = x1 + b1[None, :]
    assert o1.shape == x1.shape and o1.dtype == x1.dtype
    assert jnp.allclose(o1, r1, atol=1e-6, rtol=1e-6)

    # Case 2: lane-aligned shape -> direct path, 1-D grid with 4 row blocks.
    x2 = jax.random.normal(k3, (128, 256), dtype=jnp.float32)
    b2 = jax.random.normal(k4, (256,), dtype=jnp.float32) * 0.1
    o2 = jax.block_until_ready(add_bias(x2, b2, xla_fallback_bytes=0))
    r2 = x2 + b2[None, :]
    assert o2.shape == x2.shape and o2.dtype == x2.dtype
    assert jnp.allclose(o2, r2, atol=1e-6, rtol=1e-6)

    # Case 3: lane-sparse fallback (C=48, N not a multiple of lcm/C=8):
    # prefix rows go lane-dense through Pallas, 2 remainder rows via XLA.
    x3 = jax.random.normal(k5, (10, 48), dtype=jnp.float32)
    b3 = jax.random.normal(k6, (48,), dtype=jnp.float32) * 0.1
    o3 = jax.block_until_ready(add_bias(x3, b3, xla_fallback_bytes=0))
    r3 = x3 + b3[None, :]
    assert o3.shape == x3.shape and o3.dtype == x3.dtype
    assert jnp.allclose(o3, r3, atol=1e-6, rtol=1e-6)

    # Case 4: default dispatch on a tiny input takes the fused XLA path.
    o4 = jax.block_until_ready(add_bias(x1, b1))
    assert jnp.allclose(o4, r1, atol=1e-6, rtol=1e-6)

    print("KERNEL_OK")
</pallas_src>

<mosaic_0001>
module attributes {stable_mosaic.version = 11 : i64} {
  func.func @_add_bias_kernel(%arg0: i32, %arg1: memref<1x256xf32, #tpu.memory_space<vmem>>, %arg2: memref<1x256xf32, #tpu.memory_space<vmem>>, %arg3: memref<1x256xf32, #tpu.memory_space<vmem>>) attributes {dimension_semantics = [#tpu.dimension_semantics<parallel>], iteration_bounds = array<i64: 1>, scalar_prefetch = 0 : i64, scratch_operands = 0 : i64, tpu.core_type = #tpu.core_type<tc>, window_params = [{transform_indices = @transform_0, window_bounds = array<i64: 1, 256>}, {pipeline_mode = #tpu.pipeline_mode<synchronous>, transform_indices = @transform_1, window_bounds = array<i64: 1, 256>}, {transform_indices = @transform_2, window_bounds = array<i64: 1, 256>}]} {
    %c0 = arith.constant 0 : index
    %c0_0 = arith.constant 0 : index
    %0 = vector.load %arg1[%c0, %c0_0] : memref<1x256xf32, #tpu.memory_space<vmem>>, vector<1x256xf32>
    %c0_1 = arith.constant 0 : index
    %c0_2 = arith.constant 0 : index
    %1 = vector.load %arg2[%c0_1, %c0_2] : memref<1x256xf32, #tpu.memory_space<vmem>>, vector<1x256xf32>
    %2 = arith.addf %0, %1 : vector<1x256xf32>
    %c0_3 = arith.constant 0 : index
    %c0_4 = arith.constant 0 : index
    %3 = vector.load %arg3[%c0_3, %c0_4] : memref<1x256xf32, #tpu.memory_space<vmem>>, vector<1x256xf32>
    tpu.vector_store %arg3[%c0_3, %c0_4], %2 {strides = array<i32>} : memref<1x256xf32, #tpu.memory_space<vmem>>, vector<1x256xf32>,
    return
  }
  func.func @transform_0(%arg0: i32) -> (i32, i32) {
    %c0_i32 = arith.constant 0 : i32
    %c0_i32_0 = arith.constant 0 : i32
    return %arg0, %c0_i32 : i32, i32
  }
  func.func @transform_1(%arg0: i32) -> (i32, i32) {
    %c0_i32 = arith.constant 0 : i32
    %c0_i32_0 = arith.constant 0 : i32
    %c0_i32_1 = arith.constant 0 : i32
    return %c0_i32, %c0_i32_0 : i32, i32
  }
  func.func @transform_2(%arg0: i32) -> (i32, i32) {
    %c0_i32 = arith.constant 0 : i32
    %c0_i32_0 = arith.constant 0 : i32
    return %arg0, %c0_i32 : i32, i32
  }
}

</mosaic_0001>

<llo_original>
// kernel: tpu_custom_call.1
$region0: #{tpu_custom_call.1}
  #allocation0 [shape = 'u32[]', space=smem, size = 0x4, offset = 0x4, fixed_abs, tag = 'smem constant byte address 0x4 - core index']
  #allocation1 [shape = 'u32[144,128]{1,0:T(1,128)}', space=vmem, size = 0x12000, scoped, tag = 'internal scratch']
  %s0 = inlined_call_operand.hbm [shape: f32[1,256], index: 0, kind: input, shape index: {}]
  %s1 = inlined_call_operand.vmem [shape: f32[1,256], index: 1, kind: input, shape index: {}]
  %s2 = inlined_call_operand.hbm [shape: f32[1,256], index: 2, kind: output, shape index: {}]
  %s3 = sld [smem:[#allocation0]]
  $region22: #{tpu_custom_call.1} parent=0
    _
  %s5 = ssub.s32 1, %s3
  %s6 = scalar_select 0, %s5, %s3
  $region1: #{tpu_custom_call.1} parent=0
    #allocation2 [shape = 'u8[1024]{0}', space=vmem, size = 0x400, scoped, tag = 'input window, operand 0, single buffered']
    #allocation3 [shape = 's32[1]{0}', space=sflag, size = 0x4, scoped, tag = 'scoped memory for tpu_custom_call.1']
    #allocation4 [shape = 's32[1]{0}', space=sflag, size = 0x4, scoped, tag = 'scoped memory for tpu_custom_call.1']
    #allocation5 [shape = 'u8[1024]{0}', space=vmem, size = 0x400, scoped, tag = 'output window, operand 0, single buffered']
    %7 = vsyncpa [#allocation3], 0
    %8 = vsyncpa [#allocation4], 0
    // Predicated region
    $region2: #{tpu_custom_call.1} parent=1 // pred_check
      _
    $region3: #{tpu_custom_call.1} parent=1 // pred_check_branch
      %10 = sbr.rel (0) target = $region5
    $region4: #{tpu_custom_call.1} parent=1 // pred_region
      %s12 = ssub.s32 32, 32
      %13 = vsyncadd [#allocation3], %s12
      %s15 = sshll.u32 [#allocation2], 4
      %s16 = int_to_ptr.vmem [resolvable:$true] %s15
      %18 = dma.hbm_to_vmem [thread:$0]  %s0, 32, %s16, [#allocation3]
    $region5: #{tpu_custom_call.1} parent=1 // pred_fallthru
      _
    // Predicated region
    $region6: #{tpu_custom_call.1} parent=1 // pred_check
      _
    $region7: #{tpu_custom_call.1} parent=1 // pred_check_branch
      %20 = sbr.rel (0) target = $region9
    $region8: #{tpu_custom_call.1} parent=1 // pred_region
      _
    $region9: #{tpu_custom_call.1} parent=1 // pred_fallthru
      _
    // Predicated region
    $region10: #{tpu_custom_call.1} parent=1 // pred_check
      _
    $region11: #{tpu_custom_call.1} parent=1 // pred_check_branch
      %22 = sbr.rel (0) target = $region13
    $region12: #{tpu_custom_call.1} parent=1 // pred_region
      %23 = dma.done [#allocation3], 32
    $region13: #{tpu_custom_call.1} parent=1 // pred_fallthru
      _
    %v24 = vld [vmem:[#allocation2] sm:$0x3]
    %v25 = vld [vmem:[%s1] sm:$0x3]
    %v26 = vadd.f32 %v24, %v25
    %v27 = vlaneseq
    %vm28 = vcmp.ge.s32.totalorder %v27, 0
    %vm29 = vcmp.lt.s32.totalorder %v27, 256
    %vm30 = vmand %vm28, %vm29
    %31 = vst.msk [vmem:[#allocation5] sm:$0x3] %vm30, %v26
    // Predicated region
    $region14: #{tpu_custom_call.1} parent=1 // pred_check
      _
    $region15: #{tpu_custom_call.1} parent=1 // pred_check_branch
      %33 = sbr.rel (0) target = $region17
    $region16: #{tpu_custom_call.1} parent=1 // pred_region
      %s35 = ssub.s32 32, 32
      %36 = vsyncadd [#allocation4], %s35
      %s38 = sshll.u32 [#allocation5], 4
      %s39 = int_to_ptr.vmem [resolvable:$true] %s38
      %41 = dma.vmem_to_hbm [thread:$0]  %s39, 32, %s2, [#allocation4]
    $region17: #{tpu_custom_call.1} parent=1 // pred_fallthru
      _
    // Predicated region
    $region18: #{tpu_custom_call.1} parent=1 // pred_check
      _
    $region19: #{tpu_custom_call.1} parent=1 // pred_check_branch
      %43 = sbr.rel (0) target = $region21
    $region20: #{tpu_custom_call.1} parent=1 // pred_region
      %44 = dma.done [#allocation4], 32
    $region21: #{tpu_custom_call.1} parent=1 // pred_fallthru
      _
    %45 = vsyncpa [#allocation3], 1
    %46 = vsyncpa [#allocation4], 1

</llo_original>
